<compile_context>
chip_gen: v5e
topology: v5e:2x2
jax: 0.10.0
libtpu: 0.0.40
codegen_flags: <defaults>
</compile_context>

<pallas_src>
import jax
import jax.numpy as jnp
from jax.experimental import pallas as pl
from jax.experimental.pallas import tpu as pltpu


def _patch_embed_kernel(p_ref, w_ref, b_ref, o_ref):
    # p_ref: (tm, Kp) bf16 patch rows; w_ref: (Kp, D) bf16 weight; b_ref: (1, D) f32 bias
    acc = jnp.dot(p_ref[...], w_ref[...], preferred_element_type=jnp.float32)  # MXU, f32 acc
    o_ref[...] = (acc + b_ref[...]).astype(o_ref.dtype)


def _round_up(v, m):
    return (v + m - 1) // m * m


def _pick_tile_m(M):
    """Largest M tile that still leaves >=2 grid steps (feeds both v7x TCs); 8-aligned."""
    for tm in (1024, 512, 256, 128):
        if M >= 2 * tm:
            return tm
    if M > 8:
        return _round_up((M + 1) // 2, 8)   # exactly 2 grid steps for small M
    return _round_up(max(M, 1), 8)


def prepare_patch_embed_params(weight, bias):
    """Transpose/cast/K-pad the Conv2d weight once (hoist out of the per-call path).

    weight: (D, Cin, P, P) PyTorch Conv2d layout; bias: (D,).
    Returns (w_bf (Kp, D) bf16, b2d (1, D) f32)."""
    D, Cin, P, Pw = weight.shape
    assert P == Pw
    K = Cin * P * P
    Kp = _round_up(K, 128)
    w2d = weight.reshape(D, K).T.astype(jnp.bfloat16)          # (K, D), matches patch order
    if Kp != K:
        w2d = jnp.pad(w2d, ((0, Kp - K), (0, 0)))              # zero rows -> exact math
    b2d = bias.reshape(1, D).astype(jnp.float32)
    return w2d, b2d


def patch_embed(x, weight, bias, *, out_dtype=jnp.bfloat16, params=None):
    """x: (B, Cin, H, W); weight: (D, Cin, P, P); bias: (D,).
    Returns (B, num_patches, D) == PatchEmbed.forward(x) with flatten=True, norm=Identity.
    out_dtype defaults to bf16 (ViT blocks consume bf16); pass jnp.float32 for parity."""
    B, Cin, H, W = x.shape
    D, _, P, Pw = weight.shape
    assert P == Pw and H % P == 0 and W % P == 0 and weight.shape[1] == Cin
    gh, gw = H // P, W // P
    nP = gh * gw
    K = Cin * P * P
    Kp = _round_up(K, 128)
    M = B * nP

    if params is None:
        params = prepare_patch_embed_params(weight, bias)
    w_bf, b2d = params
    assert w_bf.shape == (Kp, D)

    # --- im2col: layout plumbing only, in bf16 so the transpose pass moves half the bytes ---
    patches = (x.astype(jnp.bfloat16)
                 .reshape(B, Cin, gh, P, gw, P)
                 .transpose(0, 2, 4, 1, 3, 5)                  # (B, gh, gw, Cin, P, P)
                 .reshape(M, K))
    if Kp != K:
        patches = jnp.pad(patches, ((0, 0), (0, Kp - K)))      # lane-align K (fuses w/ copy)

    tm = _pick_tile_m(M)
    out_itemsize = jnp.dtype(out_dtype).itemsize

    # Double-buffered tile footprint + headroom, capped safely under v7x's 64 MiB VMEM.
    tile_bytes = (2 * tm * Kp * 2 + 2 * Kp * D * 2 + 2 * D * 4 + 2 * tm * D * out_itemsize)
    vmem_limit = int(min(max(2 * tile_bytes, 32 << 20), 48 << 20))

    out = pl.pallas_call(
        _patch_embed_kernel,
        out_shape=jax.ShapeDtypeStruct((M, D), out_dtype),
        grid=(pl.cdiv(M, tm),),                                # partial last block masked on write
        in_specs=[
            pl.BlockSpec((tm, Kp), lambda i: (i, 0)),          # bf16 patch-row tile
            pl.BlockSpec((Kp, D), lambda i: (0, 0)),           # resident bf16 weight
            pl.BlockSpec((1, D), lambda i: (0, 0)),            # f32 bias
        ],
        out_specs=pl.BlockSpec((tm, D), lambda i: (i, 0)),     # lane-dense embed_dim output
        compiler_params=pltpu.CompilerParams(
            dimension_semantics=("parallel",),                 # M tiles independent (megacore)
            vmem_limit_bytes=vmem_limit,
        ),
        cost_estimate=pl.CostEstimate(
            flops=2 * M * Kp * D,
            transcendentals=0,
            bytes_accessed=M * Kp * 2 + Kp * D * 2 + D * 4 + M * D * out_itemsize,
        ),
    )(patches, w_bf, b2d)

    return out.reshape(B, nP, D)


def patch_embed_ref(x, weight, bias):
    """Pure-JAX reference mirroring the PyTorch PatchEmbed forward (norm=Identity)."""
    P = weight.shape[-1]
    y = jax.lax.conv_general_dilated(
        x, weight, window_strides=(P, P), padding="VALID",
        dimension_numbers=("NCHW", "OIHW", "NCHW"))
    B, D, gh, gw = y.shape
    y = y + bias.reshape(1, D, 1, 1)
    return y.reshape(B, D, gh * gw).transpose(0, 2, 1)          # flatten(2).transpose(1,2)


if __name__ == "__main__":
    B, Cin, H, W = 2, 3, 32, 32
    P, D = 8, 128            # 4x4 = 16 patches/image -> M = 32; K = 192 -> padded to 256

    key = jax.random.PRNGKey(0)
    kx, kw, kb = jax.random.split(key, 3)
    x = jax.random.normal(kx, (B, Cin, H, W), jnp.float32)
    weight = 0.02 * jax.random.normal(kw, (D, Cin, P, P), jnp.float32)
    bias = 0.02 * jax.random.normal(kb, (D,), jnp.float32)

    # Prepared (cached) weights — hoisted transpose/cast/pad, reused across calls.
    params = prepare_patch_embed_params(weight, bias)

    # Default path: bf16 output (halved writeback stream).
    out = jax.block_until_ready(patch_embed(x, weight, bias, params=params))
    assert out.shape == (B, (H // P) * (W // P), D) and out.dtype == jnp.bfloat16

    # Reference on the same bf16-rounded operands (f32 conv math).
    ref_bf = patch_embed_ref(
        x.astype(jnp.bfloat16).astype(jnp.float32),
        weight.astype(jnp.bfloat16).astype(jnp.float32), bias)
    assert jnp.allclose(out.astype(jnp.float32), ref_bf, atol=1e-2, rtol=1e-2), (
        float(jnp.max(jnp.abs(out.astype(jnp.float32) - ref_bf))))

    # f32-output path: only bf16 operand rounding remains -> tight tolerance.
    out32 = jax.block_until_ready(
        patch_embed(x, weight, bias, out_dtype=jnp.float32, params=params))
    assert jnp.allclose(out32, ref_bf, atol=2e-4, rtol=2e-4), (
        float(jnp.max(jnp.abs(out32 - ref_bf))))

    # Full-f32 conv reference: loose tolerance accounts for bf16 MXU operands.
    ref = patch_embed_ref(x, weight, bias)
    assert jnp.allclose(out32, ref, atol=5e-2, rtol=5e-2), (
        float(jnp.max(jnp.abs(out32 - ref))))

    print("KERNEL_OK")
</pallas_src>

<mosaic_0001>
module attributes {stable_mosaic.version = 11 : i64} {
  func.func @_patch_embed_kernel(%arg0: i32, %arg1: memref<16x256xbf16, #tpu.memory_space<vmem>>, %arg2: memref<256x128xbf16, #tpu.memory_space<vmem>>, %arg3: memref<1x128xf32, #tpu.memory_space<vmem>>, %arg4: memref<16x128xbf16, #tpu.memory_space<vmem>>) attributes {dimension_semantics = [#tpu.dimension_semantics<parallel>], iteration_bounds = array<i64: 2>, scalar_prefetch = 0 : i64, scratch_operands = 0 : i64, tpu.core_type = #tpu.core_type<tc>, window_params = [{transform_indices = @transform_0, window_bounds = array<i64: 16, 256>}, {pipeline_mode = #tpu.pipeline_mode<synchronous>, transform_indices = @transform_1, window_bounds = array<i64: 256, 128>}, {pipeline_mode = #tpu.pipeline_mode<synchronous>, transform_indices = @transform_2, window_bounds = array<i64: 1, 128>}, {transform_indices = @transform_3, window_bounds = array<i64: 16, 128>}]} {
    %c0 = arith.constant 0 : index
    %c0_0 = arith.constant 0 : index
    %0 = vector.load %arg1[%c0, %c0_0] : memref<16x256xbf16, #tpu.memory_space<vmem>>, vector<16x256xbf16>
    %c0_1 = arith.constant 0 : index
    %c0_2 = arith.constant 0 : index
    %1 = vector.load %arg2[%c0_1, %c0_2] : memref<256x128xbf16, #tpu.memory_space<vmem>>, vector<256x128xbf16>
    %cst = arith.constant dense<0.000000e+00> : vector<16x128xf32>
    %2 = tpu.matmul %0, %1, %cst {dimension_numbers = #tpu.dot_dimension_numbers<[1], [0], [0], [1], [0, 0, 1, 1], [], []>} : vector<16x256xbf16>, vector<256x128xbf16>, vector<16x128xf32> -> vector<16x128xf32>
    %c0_3 = arith.constant 0 : index
    %c0_4 = arith.constant 0 : index
    %3 = vector.load %arg3[%c0_3, %c0_4] : memref<1x128xf32, #tpu.memory_space<vmem>>, vector<1x128xf32>
    %4 = vector.broadcast %3 : vector<1x128xf32> to vector<16x128xf32>
    %5 = arith.addf %2, %4 : vector<16x128xf32>
    %6 = arith.truncf %5 : vector<16x128xf32> to vector<16x128xbf16>
    %c0_5 = arith.constant 0 : index
    %c0_6 = arith.constant 0 : index
    %7 = vector.load %arg4[%c0_5, %c0_6] : memref<16x128xbf16, #tpu.memory_space<vmem>>, vector<16x128xbf16>
    tpu.vector_store %arg4[%c0_5, %c0_6], %6 {strides = array<i32>} : memref<16x128xbf16, #tpu.memory_space<vmem>>, vector<16x128xbf16>,
    return
  }
  func.func @transform_0(%arg0: i32) -> (i32, i32) {
    %c0_i32 = arith.constant 0 : i32
    %c0_i32_0 = arith.constant 0 : i32
    return %arg0, %c0_i32 : i32, i32
  }
  func.func @transform_1(%arg0: i32) -> (i32, i32) {
    %c0_i32 = arith.constant 0 : i32
    %c0_i32_0 = arith.constant 0 : i32
    %c0_i32_1 = arith.constant 0 : i32
    return %c0_i32, %c0_i32_0 : i32, i32
  }
  func.func @transform_2(%arg0: i32) -> (i32, i32) {
    %c0_i32 = arith.constant 0 : i32
    %c0_i32_0 = arith.constant 0 : i32
    %c0_i32_1 = arith.constant 0 : i32
    return %c0_i32, %c0_i32_0 : i32, i32
  }
  func.func @transform_3(%arg0: i32) -> (i32, i32) {
    %c0_i32 = arith.constant 0 : i32
    %c0_i32_0 = arith.constant 0 : i32
    return %arg0, %c0_i32 : i32, i32
  }
}

</mosaic_0001>

<llo_original>
// kernel: tpu_custom_call.1
$region0: #{tpu_custom_call.1}
  #allocation0 [shape = 'u32[]', space=smem, size = 0x4, offset = 0x4, fixed_abs, tag = 'smem constant byte address 0x4 - core index']
  #allocation1 [shape = 'u32[72,128]{1,0:T(1,128)}', space=vmem, size = 0x9000, scoped, tag = 'internal scratch']
  %s0 = inlined_call_operand.hbm [shape: bf16[32,256], index: 0, kind: input, shape index: {}]
  %s1 = inlined_call_operand.hbm [shape: bf16[256,128], index: 1, kind: input, shape index: {}]
  %s2 = inlined_call_operand.vmem [shape: f32[1,128], index: 2, kind: input, shape index: {}]
  %s3 = inlined_call_operand.hbm [shape: bf16[32,128], index: 3, kind: output, shape index: {}]
  %s4 = sld [smem:[#allocation0]]
  $region53: #{tpu_custom_call.1} parent=0
    _
  %s6 = ssub.s32 1, %s4
  %s7 = scalar_select 0, %s6, %s4
  $region1: #{tpu_custom_call.1} parent=0
    #allocation2 [shape = 'u8[16384]{0}', space=vmem, size = 0x4000, scoped, tag = 'input window, operand 0']
    #allocation3 [shape = 's32[2]{0}', space=sflag, size = 0x8, scoped, tag = 'scoped memory for tpu_custom_call.1']
    #allocation4 [shape = 's32[2]{0}', space=sflag, size = 0x8, scoped, tag = 'scoped memory for tpu_custom_call.1']
    #allocation5 [shape = 'u8[65536]{0}', space=vmem, size = 0x10000, scoped, tag = 'input window, operand 1, single buffered']
    #allocation6 [shape = 's32[1]{0}', space=sflag, size = 0x4, scoped, tag = 'scoped memory for tpu_custom_call.1']
    #allocation7 [shape = 'u8[8192]{0}', space=vmem, size = 0x2000, scoped, tag = 'output window, operand 0']
    %8 = vsyncpa [#allocation3], 0
    %s9 = scalar_lea.sflag [#allocation3], 1
    %10 = vsyncpa %s9, 0
    %11 = vsyncpa [#allocation6], 0
    %12 = vsyncpa [#allocation4], 0
    %s13 = scalar_lea.sflag [#allocation4], 1
    %14 = vsyncpa %s13, 0
    loop: start=0, step=1, limit=4
    $region2: #{tpu_custom_call.1} parent=1 // loop_pre_header
      _
    $region3: #{tpu_custom_call.1} parent=1 // loop_header
      %s16 = sphi 0, %s20
      %p17 = scmp.ge.s32.totalorder %s16, 4
      %s26 = sphi 0, %s28
      %s29 = sphi 0, %s26
      %s30 = sphi 0, %s29
      %s46 = sphi 0, %s30
      %s50 = sphi 0, %s50
      %s52 = sphi 0, %s50
      %s53 = sphi 0, %s52
      %s67 = sphi 0, %s53
      %s71 = sphi 0, %s71
      %s73 = sphi 0, %s71
      %s74 = sphi 0, %s73
      %s88 = sphi 0, %s74
      %s94 = sphi 0, %s96
      %s97 = sphi 0, %s94
      %s98 = sphi 0, %s97
      %s114 = sphi 0, %s98
    $region4: #{tpu_custom_call.1} parent=1 // loop_header_branch
      %19 = sbr.rel (%p17) target = $region8
    $region5: #{tpu_custom_call.1} parent=1 // loop_body
      %s21 = ssub.s32 %s16, 1
      %s22 = ssub.s32 %s16, 2
      %s23 = sadd.s32 %s16, 1
      %s24 = ssub.s32 %s16, %s23
      %p25 = scmp.eq.s32.totalorder %s24, 0
      %s27 = sadd.s32 %s26, 1
      %s28 = scalar_select %p25, %s26, %s27
      %p31 = pneg %p25
      %p32 = scmp.eq.s32.totalorder %s16, 1
      %p33 = por %p31, %p32
      %p34 = scmp.ne.s32.totalorder %s26, %s29
      %p35 = scmp.eq.s32.totalorder %s16, 0
      %p36 = por %p34, %p35
      %p37 = scmp.ne.s32.totalorder %s26, %s29
      %p38 = scmp.eq.s32.totalorder %s21, 1
      %p39 = por %p37, %p38
      %p40 = scmp.ne.s32.totalorder %s29, %s30
      %p41 = scmp.eq.s32.totalorder %s21, 0
      %p42 = por %p40, %p41
      %p43 = scmp.ne.s32.totalorder %s29, %s30
      %p44 = scmp.eq.s32.totalorder %s22, 1
      %p45 = por %p43, %p44
      %p47 = scmp.ne.s32.totalorder %s30, %s46
      %p48 = scmp.eq.s32.totalorder %s22, 0
      %p49 = por %p47, %p48
      %s51 = sadd.s32 %s50, 1
      %p54 = scmp.eq.s32.totalorder %s16, 1
      %p55 = scmp.ne.s32.totalorder %s50, %s52
      %p56 = scmp.eq.s32.totalorder %s16, 0
      %p57 = por %p55, %p56
      %p58 = scmp.ne.s32.totalorder %s50, %s52
      %p59 = scmp.eq.s32.totalorder %s21, 1
      %p60 = por %p58, %p59
      %p61 = scmp.ne.s32.totalorder %s52, %s53
      %p62 = scmp.eq.s32.totalorder %s21, 0
      %p63 = por %p61, %p62
      %p64 = scmp.ne.s32.totalorder %s52, %s53
      %p65 = scmp.eq.s32.totalorder %s22, 1
      %p66 = por %p64, %p65
      %p68 = scmp.ne.s32.totalorder %s53, %s67
      %p69 = scmp.eq.s32.totalorder %s22, 0
      %p70 = por %p68, %p69
      %s72 = sadd.s32 %s71, 1
      %p75 = scmp.eq.s32.totalorder %s16, 1
      %p76 = scmp.ne.s32.totalorder %s71, %s73
      %p77 = scmp.eq.s32.totalorder %s16, 0
      %p78 = por %p76, %p77
      %p79 = scmp.ne.s32.totalorder %s71, %s73
      %p80 = scmp.eq.s32.totalorder %s21, 1
      %p81 = por %p79, %p80
      %p82 = scmp.ne.s32.totalorder %s73, %s74
      %p83 = scmp.eq.s32.totalorder %s21, 0
      %p84 = por %p82, %p83
      %p85 = scmp.ne.s32.totalorder %s73, %s74
      %p86 = scmp.eq.s32.totalorder %s22, 1
      %p87 = por %p85, %p86
      %p89 = scmp.ne.s32.totalorder %s74, %s88
      %p90 = scmp.eq.s32.totalorder %s22, 0
      %p91 = por %p89, %p90
      %s92 = ssub.s32 %s16, %s23
      %p93 = scmp.eq.s32.totalorder %s92, 0
      %s95 = sadd.s32 %s94, 1
      %s96 = scalar_select %p93, %s94, %s95
      %p99 = pneg %p93
      %p100 = scmp.eq.s32.totalorder %s16, 1
      %p101 = por %p99, %p100
      %p102 = scmp.ne.s32.totalorder %s94, %s97
      %p103 = scmp.eq.s32.totalorder %s16, 0
      %p104 = por %p102, %p103
      %p105 = scmp.ne.s32.totalorder %s94, %s97
      %p106 = scmp.eq.s32.totalorder %s21, 1
      %p107 = por %p105, %p106
      %p108 = scmp.ne.s32.totalorder %s97, %s98
      %p109 = scmp.eq.s32.totalorder %s21, 0
      %p110 = por %p108, %p109
      %p111 = scmp.ne.s32.totalorder %s97, %s98
      %p112 = scmp.eq.s32.totalorder %s22, 1
      %p113 = por %p111, %p112
      %p115 = scmp.ne.s32.totalorder %s98, %s114
      %p116 = scmp.eq.s32.totalorder %s22, 0
      %p117 = por %p115, %p116
      %p118 = scmp.le.s32.totalorder 1, %s16
      %p119 = scmp.lt.s32.totalorder %s16, 3
      %p120 = pnand %p118, %p119
      %p121 = pneg %p120
      // Predicated region
      $region9: #{tpu_custom_call.1} parent=5 // pred_check
        _
      $region10: #{tpu_custom_call.1} parent=5 // pred_check_branch
        %123 = sbr.rel (%p120) target = $region12
      $region11: #{tpu_custom_call.1} parent=5 // pred_region
        %s124 = ssub.s32 %s16, 1
        // Predicated region
        $region13: #{tpu_custom_call.1} parent=11 // pred_check
          %p125 = pneg %p63
        $region14: #{tpu_custom_call.1} parent=11 // pred_check_branch
          %127 = sbr.rel (%p125) target = $region16
        $region15: #{tpu_custom_call.1} parent=11 // pred_region
          %129 = vsyncadd [#allocation6], 0
          %s130 = sshll.u32 %s1, 4
          %s131 = int_to_ptr.hbm [resolvable:$true] %s130
          %s132 = sshll.u32 [#allocation5], 4
          %s133 = int_to_ptr.vmem [resolvable:$true] %s132
          %138 = dma.hbm_to_vmem [thread:$0]  %s131, 2048, %s133, [#allocation6], 64, 64, 4
        $region16: #{tpu_custom_call.1} parent=11 // pred_fallthru
          _
        // Predicated region
        $region17: #{tpu_custom_call.1} parent=11 // pred_check
          %p139 = pneg %p84
        $region18: #{tpu_custom_call.1} parent=11 // pred_check_branch
          %141 = sbr.rel (%p139) target = $region20
        $region19: #{tpu_custom_call.1} parent=11 // pred_region
          _
        $region20: #{tpu_custom_call.1} parent=11 // pred_fallthru
          _
      $region12: #{tpu_custom_call.1} parent=5 // pred_fallthru
        _
      %p142 = scmp.lt.s32.totalorder %s16, 2
      // Predicated region
      $region21: #{tpu_custom_call.1} parent=5 // pred_check
        %p143 = pneg %p142
      $region22: #{tpu_custom_call.1} parent=5 // pred_check_branch
        %145 = sbr.rel (%p143) target = $region24
      $region23: #{tpu_custom_call.1} parent=5 // pred_region
        // Predicated region
        $region25: #{tpu_custom_call.1} parent=23 // pred_check
          %p146 = pneg %p36
        $region26: #{tpu_custom_call.1} parent=23 // pred_check_branch
          %148 = sbr.rel (%p146) target = $region28
        $region27: #{tpu_custom_call.1} parent=23 // pred_region
          %s149 = sand.u32 %s26, 1
          %s150 = scalar_lea.sflag [#allocation3], %s149
          %s151 = sand.u32 %s26, 1
          %s152 = smul.addr %s151, 16
          %s153 = scalar_lea.vmem [#allocation2], %s152
          %s154 = smul.u32 2, %s16
          %156 = vsyncadd %s150, 0
          %s157 = smul.addr %s154, 2
          %s158 = smul.addr %s157, 4
          %s159 = scalar_lea.hbm %s0, %s158
          %s160 = sshll.u32 %s159, 4
          %s161 = int_to_ptr.hbm [resolvable:$true] %s160
          %s162 = sshll.u32 %s153, 4
          %s163 = int_to_ptr.vmem [resolvable:$true] %s162
          %168 = dma.hbm_to_vmem [thread:$0]  %s161, 256, %s163, %s150, 128, 128, 8
        $region28: #{tpu_custom_call.1} parent=23 // pred_fallthru
          _
      $region24: #{tpu_custom_call.1} parent=5 // pred_fallthru
        _
      %p169 = scmp.le.s32.totalorder 1, %s16
      %p170 = scmp.lt.s32.totalorder %s16, 3
      %p171 = pnand %p169, %p170
      %p172 = pneg %p171
      // Predicated region
      $region29: #{tpu_custom_call.1} parent=5 // pred_check
        _
      $region30: #{tpu_custom_call.1} parent=5 // pred_check_branch
        %174 = sbr.rel (%p171) target = $region32
      $region31: #{tpu_custom_call.1} parent=5 // pred_region
        %s175 = ssub.s32 %s16, 1
        %s176 = sand.u32 %s29, 1
        %s177 = scalar_lea.sflag [#allocation3], %s176
        %s178 = sand.u32 %s29, 1
        %s179 = smul.addr %s178, 16
        %s180 = scalar_lea.vmem [#allocation2], %s179
        // Predicated region
        $region33: #{tpu_custom_call.1} parent=31 // pred_check
          %p181 = pneg %p42
        $region34: #{tpu_custom_call.1} parent=31 // pred_check_branch
          %183 = sbr.rel (%p181) target = $region36
        $region35: #{tpu_custom_call.1} parent=31 // pred_region
          %185 = dma.done %s177, 256
        $region36: #{tpu_custom_call.1} parent=31 // pred_fallthru
          _
        // Predicated region
        $region37: #{tpu_custom_call.1} parent=31 // pred_check
          %p186 = pneg %p63
        $region38: #{tpu_custom_call.1} parent=31 // pred_check_branch
          %188 = sbr.rel (%p186) target = $region40
        $region39: #{tpu_custom_call.1} parent=31 // pred_region
          %190 = dma.done [#allocation6], 2048
        $region40: #{tpu_custom_call.1} parent=31 // pred_fallthru
          _
        %s191 = sand.u32 %s29, 1
        %s192 = scalar_lea.sflag [#allocation3], %s191
        %s193 = sand.u32 %s29, 1
        %s194 = smul.addr %s193, 16
        %s195 = scalar_lea.vmem [#allocation2], %s194
        %p196 = pneg %p42
        %p197 = pneg %p39
        %p198 = pneg %p63
        %p199 = pneg %p60
        %p200 = pneg %p84
        %p201 = pneg %p81
        %p202 = pneg %p110
        %p203 = pneg %p107
        %s204 = sand.u32 %s97, 1
        %s205 = scalar_lea.sflag [#allocation4], %s204
        %s206 = sand.u32 %s97, 1
        %s207 = smul.addr %s206, 8
        %s208 = scalar_lea.vmem [#allocation7], %s207
        %s209 = smul.u32 2, %s21
        %s210 = smul.u32 2, %s21
        %v211 = vld [vmem:[%s180] sm:$0xff]
        %v212 = vld [vmem:[%s180 + $0x8] sm:$0xff]
        %v213 = vld [vmem:[#allocation5] sm:$0xf]
        %v214 = vld [vmem:[#allocation5 + $0x4] sm:$0xf]
        %v215 = vld [vmem:[#allocation5 + $0x8] sm:$0xf]
        %v216 = vld [vmem:[#allocation5 + $0xc] sm:$0xf]
        %v217 = vld [vmem:[#allocation5 + $0x10] sm:$0xf]
        %v218 = vld [vmem:[#allocation5 + $0x14] sm:$0xf]
        %v219 = vld [vmem:[#allocation5 + $0x18] sm:$0xf]
        %v220 = vld [vmem:[#allocation5 + $0x1c] sm:$0xf]
        %v221 = vld [vmem:[#allocation5 + $0x20] sm:$0xf]
        %v222 = vld [vmem:[#allocation5 + $0x24] sm:$0xf]
        %v223 = vld [vmem:[#allocation5 + $0x28] sm:$0xf]
        %v224 = vld [vmem:[#allocation5 + $0x2c] sm:$0xf]
        %v225 = vld [vmem:[#allocation5 + $0x30] sm:$0xf]
        %v226 = vld [vmem:[#allocation5 + $0x34] sm:$0xf]
        %v227 = vld [vmem:[#allocation5 + $0x38] sm:$0xf]
        %v228 = vld [vmem:[#allocation5 + $0x3c] sm:$0xf]
        %v229 = vld [vmem:[#allocation5 + $0x40] sm:$0xf]
        %v230 = vld [vmem:[#allocation5 + $0x44] sm:$0xf]
        %v231 = vld [vmem:[#allocation5 + $0x48] sm:$0xf]
        %v232 = vld [vmem:[#allocation5 + $0x4c] sm:$0xf]
        %v233 = vld [vmem:[#allocation5 + $0x50] sm:$0xf]
        %v234 = vld [vmem:[#allocation5 + $0x54] sm:$0xf]
        %v235 = vld [vmem:[#allocation5 + $0x58] sm:$0xf]
        %v236 = vld [vmem:[#allocation5 + $0x5c] sm:$0xf]
        %v237 = vld [vmem:[#allocation5 + $0x60] sm:$0xf]
        %v238 = vld [vmem:[#allocation5 + $0x64] sm:$0xf]
        %v239 = vld [vmem:[#allocation5 + $0x68] sm:$0xf]
        %v240 = vld [vmem:[#allocation5 + $0x6c] sm:$0xf]
        %v241 = vld [vmem:[#allocation5 + $0x70] sm:$0xf]
        %v242 = vld [vmem:[#allocation5 + $0x74] sm:$0xf]
        %v243 = vld [vmem:[#allocation5 + $0x78] sm:$0xf]
        %v244 = vld [vmem:[#allocation5 + $0x7c] sm:$0xf]
        %v245 = vld [vmem:[%s2] sm:$0x1]
        %v247 = vperm.slane %v245, 0
        %v251 = vunpack.c.l.b16 %v211
        %v252 = vunpack.c.h.b16 %v211
        %v253 = vunpack.c.l.b16 %v212
        %v254 = vunpack.c.h.b16 %v212
        %v255 = vpack.c.b16 %v253, %v251
        %v256 = vpack.c.b16 %v254, %v252
        %v291 = vunpack.c.l.b16 %v213
        %v292 = vunpack.c.l.b16 %v214
        %v293 = vunpack.c.l.b16 %v215
        %v294 = vunpack.c.l.b16 %v216
        %v295 = vunpack.c.l.b16 %v217
        %v296 = vunpack.c.l.b16 %v218
        %v297 = vunpack.c.l.b16 %v219
        %v298 = vunpack.c.l.b16 %v220
        %v299 = vunpack.c.l.b16 %v221
        %v300 = vunpack.c.l.b16 %v222
        %v301 = vunpack.c.l.b16 %v223
        %v302 = vunpack.c.l.b16 %v224
        %v303 = vunpack.c.l.b16 %v225
        %v304 = vunpack.c.l.b16 %v226
        %v305 = vunpack.c.l.b16 %v227
        %v306 = vunpack.c.l.b16 %v228
        %v307 = vunpack.c.l.b16 %v229
        %v308 = vunpack.c.l.b16 %v230
        %v309 = vunpack.c.l.b16 %v231
        %v310 = vunpack.c.l.b16 %v232
        %v311 = vunpack.c.l.b16 %v233
        %v312 = vunpack.c.l.b16 %v234
        %v313 = vunpack.c.l.b16 %v235
        %v314 = vunpack.c.l.b16 %v236
        %v315 = vunpack.c.l.b16 %v237
        %v316 = vunpack.c.l.b16 %v238
        %v317 = vunpack.c.l.b16 %v239
        %v318 = vunpack.c.l.b16 %v240
        %v319 = vunpack.c.l.b16 %v241
        %v320 = vunpack.c.l.b16 %v242
        %v321 = vunpack.c.l.b16 %v243
        %v322 = vunpack.c.l.b16 %v244
        %v323 = vpack.c.b16 %v292, %v291
        %v324 = vpack.c.b16 %v294, %v293
        %v325 = vpack.c.b16 %v296, %v295
        %v326 = vpack.c.b16 %v298, %v297
        %v327 = vpack.c.b16 %v300, %v299
        %v328 = vpack.c.b16 %v302, %v301
        %v329 = vpack.c.b16 %v304, %v303
        %v330 = vpack.c.b16 %v306, %v305
        %v331 = vpack.c.b16 %v308, %v307
        %v332 = vpack.c.b16 %v310, %v309
        %v333 = vpack.c.b16 %v312, %v311
        %v334 = vpack.c.b16 %v314, %v313
        %v335 = vpack.c.b16 %v316, %v315
        %v336 = vpack.c.b16 %v318, %v317
        %v337 = vpack.c.b16 %v320, %v319
        %v338 = vpack.c.b16 %v322, %v321
        %355 = vmatpush.bf16.msra.mxu0 %v330
        %356 = vmatpush.bf16.msra.mxu0 %v329
        %357 = vmatpush.bf16.msra.mxu0 %v328
        %358 = vmatpush.bf16.msra.mxu0 %v327
        %359 = vmatpush.bf16.msra.mxu0 %v326
        %360 = vmatpush.bf16.msra.mxu0 %v325
        %361 = vmatpush.bf16.msra.mxu0 %v324
        %362 = vmatpush.bf16.msra.mxu0 %v323
        %363 = vmatmul.bf16.gmra.mxu0 %v255
        %v364 = vpop.f32.mrf.mxu0
        %v365 = vadd.f32 %v247, %v364
        %v366 = vpop.f32.mrf.mxu0
        %v367 = vadd.f32 %v247, %v366
        %368 = vdwg.mxu0
        %369 = vmatpush.bf16.msra.mxu0 %v338
        %370 = vmatpush.bf16.msra.mxu0 %v337
        %371 = vmatpush.bf16.msra.mxu0 %v336
        %372 = vmatpush.bf16.msra.mxu0 %v335
        %373 = vmatpush.bf16.msra.mxu0 %v334
        %374 = vmatpush.bf16.msra.mxu0 %v333
        %375 = vmatpush.bf16.msra.mxu0 %v332
        %376 = vmatpush.bf16.msra.mxu0 %v331
        %377 = vmatmul.bf16.gmra.mxu0 %v256
        %v378 = vpop.f32.mrf.mxu0
        %v379 = vadd.f32 %v365, %v378
        %v380 = vpop.f32.mrf.mxu0
        %v381 = vadd.f32 %v367, %v380
        %382 = vdwg.mxu0
        %v383 = vpack.c.bf16 %v379, %v379
        %v384 = vpack.c.bf16 %v381, %v381
        %385 = vst [vmem:[%s208] sm:$0xf] %v383
        %386 = vst [vmem:[%s208 + $0x4] sm:$0xf] %v384
        %s387 = sand.u32 %s97, 1
        %s388 = scalar_lea.sflag [#allocation4], %s387
        %s389 = sand.u32 %s97, 1
        %s390 = smul.addr %s389, 8
        %s391 = scalar_lea.vmem [#allocation7], %s390
        // Predicated region
        $region41: #{tpu_custom_call.1} parent=31 // pred_check
          %p392 = pneg %p107
        $region42: #{tpu_custom_call.1} parent=31 // pred_check_branch
          %394 = sbr.rel (%p392) target = $region44
        $region43: #{tpu_custom_call.1} parent=31 // pred_region
          %s395 = smul.u32 2, %s21
          %397 = vsyncadd %s388, 0
          %s398 = smul.addr %s395, 4
          %s399 = scalar_lea.hbm %s3, %s398
          %s400 = sshll.u32 %s391, 4
          %s401 = int_to_ptr.vmem [resolvable:$true] %s400
          %s402 = sshll.u32 %s399, 4
          %s403 = int_to_ptr.hbm [resolvable:$true] %s402
          %408 = dma.vmem_to_hbm [thread:$0]  %s401, 128, %s403, %s388, 64, 64, 4
        $region44: #{tpu_custom_call.1} parent=31 // pred_fallthru
          _
      $region32: #{tpu_custom_call.1} parent=5 // pred_fallthru
        _
      %p409 = scmp.le.s32.totalorder 2, %s16
      // Predicated region
      $region45: #{tpu_custom_call.1} parent=5 // pred_check
        %p410 = pneg %p409
      $region46: #{tpu_custom_call.1} parent=5 // pred_check_branch
        %412 = sbr.rel (%p410) target = $region48
      $region47: #{tpu_custom_call.1} parent=5 // pred_region
        %s413 = ssub.s32 %s16, 2
        // Predicated region
        $region49: #{tpu_custom_call.1} parent=47 // pred_check
          %p414 = pneg %p113
        $region50: #{tpu_custom_call.1} parent=47 // pred_check_branch
          %416 = sbr.rel (%p414) target = $region52
        $region51: #{tpu_custom_call.1} parent=47 // pred_region
          %s417 = sand.u32 %s98, 1
          %s418 = scalar_lea.sflag [#allocation4], %s417
          %s419 = sand.u32 %s98, 1
          %s420 = smul.addr %s419, 8
          %s421 = scalar_lea.vmem [#allocation7], %s420
          %423 = dma.done %s418, 128
        $region52: #{tpu_custom_call.1} parent=47 // pred_fallthru
          _
      $region48: #{tpu_custom_call.1} parent=5 // pred_fallthru
        _
    $region6: #{tpu_custom_call.1} parent=1 // loop_footer
      %s20 = sadd.s32 1, %s16
    $region7: #{tpu_custom_call.1} parent=1 // loop_footer_branch
      %15 = sbr.rel target = $region3
    $region8: #{tpu_custom_call.1} parent=1 // loop_exit
      _
    %424 = vsyncpa [#allocation3], 1
    %s425 = scalar_lea.sflag [#allocation3], 1
    %426 = vsyncpa %s425, 1
    %427 = vsyncpa [#allocation6], 1
    %428 = vsyncpa [#allocation4], 1
    %s429 = scalar_lea.sflag [#allocation4], 1
    %430 = vsyncpa %s429, 1

</llo_original>
